<compile_context>
chip_gen: v6e
topology: v6e:2x2x1
jax: 0.10.0
libtpu: 0.0.40
codegen_flags: <defaults>
</compile_context>

<pallas_src>
import functools

import jax
import jax.numpy as jnp
from jax.experimental import pallas as pl
from jax.experimental.pallas import tpu as pltpu


def _coupling_kernel(x_ref, w1t_ref, b1_ref, w2t_ref, b2_ref, y2_ref, *, half):
    """y2 = x2 + f(x1),  f(x1) = tanh(x1 @ W1^T + b1) @ W2^T + b2.

    w*t_ref hold the already-transposed weights (in, out), so both matmuls are
    plain `lhs @ rhs` MXU contractions with f32 accumulation.
    """
    x1 = x_ref[:, :half]
    x2 = x_ref[:, half:]

    h = jnp.tanh(
        jnp.dot(x1, w1t_ref[...], preferred_element_type=jnp.float32)
        + b1_ref[...]
    )
    f = (
        jnp.dot(h.astype(w2t_ref.dtype), w2t_ref[...],
                preferred_element_type=jnp.float32)
        + b2_ref[...]
    )
    y2_ref[...] = (x2.astype(jnp.float32) + f).astype(y2_ref.dtype)


def _pick_batch_tile(B, preferred):
    for bt in (preferred, 1024, 512, 256, 128, 64, 32, 16, 8):
        if bt <= B and B % bt == 0:
            return bt
    return B  # small / odd batch: single full-batch block (equals full dim -> legal)


def _xla_fallback(x, w1, b1, w2, b2, reverse):
    half = x.shape[-1] // 2
    x1, x2 = x[..., :half], x[..., half:]
    f = jnp.tanh(x1 @ w1.T + b1) @ w2.T + b2
    y2 = x2 - f if reverse else x2 + f
    return jnp.concatenate([x1, y2], axis=-1)


def invertible_coupling(x, w1, b1, w2, b2, reverse=False, batch_tile=512):
    """JAX/Pallas equivalent of InvertibleCoupling.forward.

    x       : (..., dim)
    w1, w2  : (dim//2, dim//2)  PyTorch nn.Linear layout (out, in)
    b1, b2  : (dim//2,)
    """
    orig_shape = x.shape
    dim = orig_shape[-1]
    half = dim // 2
    assert dim == 2 * half, "dim must be even"

    if half % 128 != 0:
        # Non-lane-dense half: masked partial stores + tiny MXU tiles — not worth
        # a kernel.  TODO(synk): pad the feature dim to 128 if this path gets hot.
        return _xla_fallback(x, w1, b1, w2, b2, reverse)

    # Fold the reverse sign into the second linear layer and pre-transpose the
    # weights to (in, out) so the kernel does plain `lhs @ rhs` (one-time XLA op,
    # weights stay resident in VMEM for the whole grid).
    if reverse:
        w2 = -w2
        b2 = -b2
    w1_t = jnp.asarray(w1).T
    w2_t = jnp.asarray(w2).T
    b1_r = jnp.asarray(b1).reshape(1, half)
    b2_r = jnp.asarray(b2).reshape(1, half)

    x2d = x.reshape(-1, dim)
    B = x2d.shape[0]

    bt = _pick_batch_tile(B, batch_tile)
    nb = B // bt

    itemsize_x = jnp.dtype(x.dtype).itemsize
    itemsize_w = jnp.dtype(w1_t.dtype).itemsize
    # VMEM budget: resident weights/biases + double-buffered activation tiles.
    # TODO(synk): for half >~ 2048 add a K grid axis + f32 accumulator instead of
    # keeping full weights resident.
    vmem_bytes = (
        2 * half * half * itemsize_w       # W1^T, W2^T resident
        + 2 * half * 4                     # biases
        + 2 * bt * dim * itemsize_x        # x tile, double-buffered
        + 2 * bt * half * itemsize_x       # y2 tile, double-buffered
        + (2 << 20)                        # headroom for f32 intermediates
    )
    compiler_params = pltpu.CompilerParams(
        dimension_semantics=("parallel",),  # batch blocks independent -> megacore
        # Clamp to 64 MiB so the limit stays legal on v7x (64 MiB physical VMEM).
        vmem_limit_bytes=min(max(vmem_bytes + vmem_bytes // 2, 32 * 1024 * 1024),
                             64 * 1024 * 1024),
    )

    kernel = functools.partial(_coupling_kernel, half=half)

    y2d = pl.pallas_call(
        kernel,
        out_shape=jax.ShapeDtypeStruct((B, dim), x.dtype),
        grid=(nb,),
        in_specs=[
            pl.BlockSpec((bt, dim), lambda i: (i, 0)),     # x tile (full width, lane-dense)
            pl.BlockSpec((half, half), lambda i: (0, 0)),  # W1^T resident across all steps
            pl.BlockSpec((1, half), lambda i: (0, 0)),     # b1 resident
            pl.BlockSpec((half, half), lambda i: (0, 0)),  # W2^T resident
            pl.BlockSpec((1, half), lambda i: (0, 0)),     # b2 resident
        ],
        # Only the y2 half (column block 1) is ever written; since the output
        # aliases x, columns [:half] keep x1 — no y1 writeback at all.
        out_specs=pl.BlockSpec((bt, half), lambda i: (i, 1)),
        input_output_aliases={0: 0},
        compiler_params=compiler_params,
    )(x2d, w1_t, b1_r, w2_t, b2_r)
    return y2d.reshape(orig_shape)


def _reference(x, w1, b1, w2, b2, reverse=False):
    return _xla_fallback(x, w1, b1, w2, b2, reverse)


if __name__ == "__main__":
    # Small but tile-legal shapes: half = 128 (lane width), batch tile 8 -> 2 grid steps.
    B, dim = 16, 256
    half = dim // 2

    key = jax.random.PRNGKey(0)
    kx, k1, k2, k3, k4 = jax.random.split(key, 5)

    # Deterministic init mimicking PyTorch nn.Linear default: U(-1/sqrt(in), 1/sqrt(in))
    bound = 1.0 / jnp.sqrt(jnp.float32(half))
    x = jax.random.normal(kx, (B, dim), dtype=jnp.float32)
    w1 = jax.random.uniform(k1, (half, half), jnp.float32, -bound, bound)
    b1 = jax.random.uniform(k2, (half,), jnp.float32, -bound, bound)
    w2 = jax.random.uniform(k3, (half, half), jnp.float32, -bound, bound)
    b2 = jax.random.uniform(k4, (half,), jnp.float32, -bound, bound)

    # Forward
    y = invertible_coupling(x, w1, b1, w2, b2, reverse=False, batch_tile=8)
    y = jax.block_until_ready(y)
    y_ref = _reference(x, w1, b1, w2, b2, reverse=False)
    assert jnp.allclose(y, y_ref, atol=1e-5, rtol=1e-5), "forward mismatch"

    # Invertibility: reverse(forward(x)) == x
    x_rec = invertible_coupling(y, w1, b1, w2, b2, reverse=True, batch_tile=8)
    x_rec = jax.block_until_ready(x_rec)
    assert jnp.allclose(x_rec, x, atol=1e-5, rtol=1e-5), "inverse mismatch"

    # Leading-dim flattening path: (2, 8, dim) -> same kernel after reshape.
    x3 = x.reshape(2, 8, dim)
    y3 = invertible_coupling(x3, w1, b1, w2, b2, reverse=False, batch_tile=8)
    y3 = jax.block_until_ready(y3)
    assert jnp.allclose(y3.reshape(B, dim), y_ref, atol=1e-5, rtol=1e-5), "3-D mismatch"

    print("KERNEL_OK")
</pallas_src>

<mosaic_0001>
module attributes {stable_mosaic.version = 11 : i64} {
  func.func @_coupling_kernel(%arg0: i32, %arg1: memref<8x256xf32, #tpu.memory_space<vmem>>, %arg2: memref<128x128xf32, #tpu.memory_space<vmem>>, %arg3: memref<1x128xf32, #tpu.memory_space<vmem>>, %arg4: memref<128x128xf32, #tpu.memory_space<vmem>>, %arg5: memref<1x128xf32, #tpu.memory_space<vmem>>, %arg6: memref<8x128xf32, #tpu.memory_space<vmem>>) attributes {dimension_semantics = [#tpu.dimension_semantics<parallel>], iteration_bounds = array<i64: 2>, scalar_prefetch = 0 : i64, scratch_operands = 0 : i64, tpu.core_type = #tpu.core_type<tc>, window_params = [{transform_indices = @transform_0, window_bounds = array<i64: 8, 256>}, {pipeline_mode = #tpu.pipeline_mode<synchronous>, transform_indices = @transform_1, window_bounds = array<i64: 128, 128>}, {pipeline_mode = #tpu.pipeline_mode<synchronous>, transform_indices = @transform_2, window_bounds = array<i64: 1, 128>}, {pipeline_mode = #tpu.pipeline_mode<synchronous>, transform_indices = @transform_3, window_bounds = array<i64: 128, 128>}, {pipeline_mode = #tpu.pipeline_mode<synchronous>, transform_indices = @transform_4, window_bounds = array<i64: 1, 128>}, {transform_indices = @transform_5, window_bounds = array<i64: 8, 128>}]} {
    %c0 = arith.constant 0 : index
    %c0_0 = arith.constant 0 : index
    %0 = vector.load %arg1[%c0, %c0_0] : memref<8x256xf32, #tpu.memory_space<vmem>>, vector<8x128xf32>
    %c0_1 = arith.constant 0 : index
    %c128 = arith.constant 128 : index
    %1 = vector.load %arg1[%c0_1, %c128] : memref<8x256xf32, #tpu.memory_space<vmem>>, vector<8x128xf32>
    %c0_2 = arith.constant 0 : index
    %c0_3 = arith.constant 0 : index
    %2 = vector.load %arg2[%c0_2, %c0_3] : memref<128x128xf32, #tpu.memory_space<vmem>>, vector<128x128xf32>
    %cst = arith.constant dense<0.000000e+00> : vector<8x128xf32>
    %3 = tpu.matmul %0, %2, %cst {dimension_numbers = #tpu.dot_dimension_numbers<[1], [0], [0], [1], [0, 0, 1, 1], [], []>} : vector<8x128xf32>, vector<128x128xf32>, vector<8x128xf32> -> vector<8x128xf32>
    %c0_4 = arith.constant 0 : index
    %c0_5 = arith.constant 0 : index
    %4 = vector.load %arg3[%c0_4, %c0_5] : memref<1x128xf32, #tpu.memory_space<vmem>>, vector<1x128xf32>
    %5 = vector.broadcast %4 : vector<1x128xf32> to vector<8x128xf32>
    %6 = arith.addf %3, %5 : vector<8x128xf32>
    %7 = math.tanh %6 : vector<8x128xf32>
    %c0_6 = arith.constant 0 : index
    %c0_7 = arith.constant 0 : index
    %8 = vector.load %arg4[%c0_6, %c0_7] : memref<128x128xf32, #tpu.memory_space<vmem>>, vector<128x128xf32>
    %cst_8 = arith.constant dense<0.000000e+00> : vector<8x128xf32>
    %9 = tpu.matmul %7, %8, %cst_8 {dimension_numbers = #tpu.dot_dimension_numbers<[1], [0], [0], [1], [0, 0, 1, 1], [], []>} : vector<8x128xf32>, vector<128x128xf32>, vector<8x128xf32> -> vector<8x128xf32>
    %c0_9 = arith.constant 0 : index
    %c0_10 = arith.constant 0 : index
    %10 = vector.load %arg5[%c0_9, %c0_10] : memref<1x128xf32, #tpu.memory_space<vmem>>, vector<1x128xf32>
    %11 = vector.broadcast %10 : vector<1x128xf32> to vector<8x128xf32>
    %12 = arith.addf %9, %11 : vector<8x128xf32>
    %13 = arith.addf %1, %12 : vector<8x128xf32>
    %c0_11 = arith.constant 0 : index
    %c0_12 = arith.constant 0 : index
    %14 = vector.load %arg6[%c0_11, %c0_12] : memref<8x128xf32, #tpu.memory_space<vmem>>, vector<8x128xf32>
    tpu.vector_store %arg6[%c0_11, %c0_12], %13 {strides = array<i32>} : memref<8x128xf32, #tpu.memory_space<vmem>>, vector<8x128xf32>,
    return
  }
  func.func @transform_0(%arg0: i32) -> (i32, i32) {
    %c0_i32 = arith.constant 0 : i32
    %c0_i32_0 = arith.constant 0 : i32
    return %arg0, %c0_i32 : i32, i32
  }
  func.func @transform_1(%arg0: i32) -> (i32, i32) {
    %c0_i32 = arith.constant 0 : i32
    %c0_i32_0 = arith.constant 0 : i32
    %c0_i32_1 = arith.constant 0 : i32
    return %c0_i32, %c0_i32_0 : i32, i32
  }
  func.func @transform_2(%arg0: i32) -> (i32, i32) {
    %c0_i32 = arith.constant 0 : i32
    %c0_i32_0 = arith.constant 0 : i32
    %c0_i32_1 = arith.constant 0 : i32
    return %c0_i32, %c0_i32_0 : i32, i32
  }
  func.func @transform_3(%arg0: i32) -> (i32, i32) {
    %c0_i32 = arith.constant 0 : i32
    %c0_i32_0 = arith.constant 0 : i32
    %c0_i32_1 = arith.constant 0 : i32
    return %c0_i32, %c0_i32_0 : i32, i32
  }
  func.func @transform_4(%arg0: i32) -> (i32, i32) {
    %c0_i32 = arith.constant 0 : i32
    %c0_i32_0 = arith.constant 0 : i32
    %c0_i32_1 = arith.constant 0 : i32
    return %c0_i32, %c0_i32_0 : i32, i32
  }
  func.func @transform_5(%arg0: i32) -> (i32, i32) {
    %c1_i32 = arith.constant 1 : i32
    %c0_i32 = arith.constant 0 : i32
    return %arg0, %c1_i32 : i32, i32
  }
}

</mosaic_0001>

<llo_original>
// kernel: tpu_custom_call.1
$region0: #{tpu_custom_call.1}
  #allocation0 [shape = 'u32[]', space=smem, size = 0x4, offset = 0x4, fixed_abs, tag = 'smem constant byte address 0x4 - core index']
  #allocation1 [shape = 'u32[144,128]{1,0:T(1,128)}', space=vmem, size = 0x12000, scoped, tag = 'internal scratch']
  %s0 = inlined_call_operand.hbm [shape: f32[16,256], index: 0, kind: input, shape index: {}, may-alias: {0,5}]
  %s1 = inlined_call_operand.hbm [shape: f32[128,128], index: 1, kind: input, shape index: {}]
  %s2 = inlined_call_operand.vmem [shape: f32[1,128], index: 2, kind: input, shape index: {}]
  %s3 = inlined_call_operand.hbm [shape: f32[128,128], index: 3, kind: input, shape index: {}]
  %s4 = inlined_call_operand.vmem [shape: f32[1,128], index: 4, kind: input, shape index: {}]
  %s5 = inlined_call_operand.hbm [shape: f32[16,256], index: 5, kind: output, shape index: {}, may-alias: {0,5}]
  %s6 = sld [smem:[#allocation0]]
  $region65: #{tpu_custom_call.1} parent=0
    _
  %s8 = ssub.s32 1, %s6
  %s9 = scalar_select 0, %s8, %s6
  $region1: #{tpu_custom_call.1} parent=0
    #allocation2 [shape = 'u8[16384]{0}', space=vmem, size = 0x4000, scoped, tag = 'input window, operand 0']
    #allocation3 [shape = 's32[2]{0}', space=sflag, size = 0x8, scoped, tag = 'scoped memory for tpu_custom_call.1']
    #allocation4 [shape = 's32[2]{0}', space=sflag, size = 0x8, scoped, tag = 'scoped memory for tpu_custom_call.1']
    #allocation5 [shape = 'u8[65536]{0}', space=vmem, size = 0x10000, scoped, tag = 'input window, operand 1, single buffered']
    #allocation6 [shape = 's32[1]{0}', space=sflag, size = 0x4, scoped, tag = 'scoped memory for tpu_custom_call.1']
    #allocation7 [shape = 'u8[65536]{0}', space=vmem, size = 0x10000, scoped, tag = 'input window, operand 3, single buffered']
    #allocation8 [shape = 'u8[8192]{0}', space=vmem, size = 0x2000, scoped, tag = 'output window, operand 0']
    %10 = vsyncpa [#allocation3], 0
    %s11 = scalar_lea.sflag [#allocation3], 1
    %12 = vsyncpa %s11, 0
    %13 = vsyncpa [#allocation6], 0
    %14 = vsyncpa [#allocation4], 0
    %s15 = scalar_lea.sflag [#allocation4], 1
    %16 = vsyncpa %s15, 0
    loop: start=0, step=1, limit=4
    $region2: #{tpu_custom_call.1} parent=1 // loop_pre_header
      _
    $region3: #{tpu_custom_call.1} parent=1 // loop_header
      %s18 = sphi 0, %s22
      %p19 = scmp.ge.s32.totalorder %s18, 4
      %s28 = sphi 0, %s30
      %s31 = sphi 0, %s28
      %s32 = sphi 0, %s31
      %s48 = sphi 0, %s32
      %s52 = sphi 0, %s52
      %s54 = sphi 0, %s52
      %s55 = sphi 0, %s54
      %s69 = sphi 0, %s55
      %s73 = sphi 0, %s73
      %s75 = sphi 0, %s73
      %s76 = sphi 0, %s75
      %s90 = sphi 0, %s76
      %s94 = sphi 0, %s94
      %s96 = sphi 0, %s94
      %s97 = sphi 0, %s96
      %s111 = sphi 0, %s97
      %s115 = sphi 0, %s115
      %s117 = sphi 0, %s115
      %s118 = sphi 0, %s117
      %s132 = sphi 0, %s118
      %s138 = sphi 0, %s140
      %s141 = sphi 0, %s138
      %s142 = sphi 0, %s141
      %s158 = sphi 0, %s142
    $region4: #{tpu_custom_call.1} parent=1 // loop_header_branch
      %21 = sbr.rel (%p19) target = $region8
    $region5: #{tpu_custom_call.1} parent=1 // loop_body
      %s23 = ssub.s32 %s18, 1
      %s24 = ssub.s32 %s18, 2
      %s25 = sadd.s32 %s18, 1
      %s26 = ssub.s32 %s18, %s25
      %p27 = scmp.eq.s32.totalorder %s26, 0
      %s29 = sadd.s32 %s28, 1
      %s30 = scalar_select %p27, %s28, %s29
      %p33 = pneg %p27
      %p34 = scmp.eq.s32.totalorder %s18, 1
      %p35 = por %p33, %p34
      %p36 = scmp.ne.s32.totalorder %s28, %s31
      %p37 = scmp.eq.s32.totalorder %s18, 0
      %p38 = por %p36, %p37
      %p39 = scmp.ne.s32.totalorder %s28, %s31
      %p40 = scmp.eq.s32.totalorder %s23, 1
      %p41 = por %p39, %p40
      %p42 = scmp.ne.s32.totalorder %s31, %s32
      %p43 = scmp.eq.s32.totalorder %s23, 0
      %p44 = por %p42, %p43
      %p45 = scmp.ne.s32.totalorder %s31, %s32
      %p46 = scmp.eq.s32.totalorder %s24, 1
      %p47 = por %p45, %p46
      %p49 = scmp.ne.s32.totalorder %s32, %s48
      %p50 = scmp.eq.s32.totalorder %s24, 0
      %p51 = por %p49, %p50
      %s53 = sadd.s32 %s52, 1
      %p56 = scmp.eq.s32.totalorder %s18, 1
      %p57 = scmp.ne.s32.totalorder %s52, %s54
      %p58 = scmp.eq.s32.totalorder %s18, 0
      %p59 = por %p57, %p58
      %p60 = scmp.ne.s32.totalorder %s52, %s54
      %p61 = scmp.eq.s32.totalorder %s23, 1
      %p62 = por %p60, %p61
      %p63 = scmp.ne.s32.totalorder %s54, %s55
      %p64 = scmp.eq.s32.totalorder %s23, 0
      %p65 = por %p63, %p64
      %p66 = scmp.ne.s32.totalorder %s54, %s55
      %p67 = scmp.eq.s32.totalorder %s24, 1
      %p68 = por %p66, %p67
      %p70 = scmp.ne.s32.totalorder %s55, %s69
      %p71 = scmp.eq.s32.totalorder %s24, 0
      %p72 = por %p70, %p71
      %s74 = sadd.s32 %s73, 1
      %p77 = scmp.eq.s32.totalorder %s18, 1
      %p78 = scmp.ne.s32.totalorder %s73, %s75
      %p79 = scmp.eq.s32.totalorder %s18, 0
      %p80 = por %p78, %p79
      %p81 = scmp.ne.s32.totalorder %s73, %s75
      %p82 = scmp.eq.s32.totalorder %s23, 1
      %p83 = por %p81, %p82
      %p84 = scmp.ne.s32.totalorder %s75, %s76
      %p85 = scmp.eq.s32.totalorder %s23, 0
      %p86 = por %p84, %p85
      %p87 = scmp.ne.s32.totalorder %s75, %s76
      %p88 = scmp.eq.s32.totalorder %s24, 1
      %p89 = por %p87, %p88
      %p91 = scmp.ne.s32.totalorder %s76, %s90
      %p92 = scmp.eq.s32.totalorder %s24, 0
      %p93 = por %p91, %p92
      %s95 = sadd.s32 %s94, 1
      %p98 = scmp.eq.s32.totalorder %s18, 1
      %p99 = scmp.ne.s32.totalorder %s94, %s96
      %p100 = scmp.eq.s32.totalorder %s18, 0
      %p101 = por %p99, %p100
      %p102 = scmp.ne.s32.totalorder %s94, %s96
      %p103 = scmp.eq.s32.totalorder %s23, 1
      %p104 = por %p102, %p103
      %p105 = scmp.ne.s32.totalorder %s96, %s97
      %p106 = scmp.eq.s32.totalorder %s23, 0
      %p107 = por %p105, %p106
      %p108 = scmp.ne.s32.totalorder %s96, %s97
      %p109 = scmp.eq.s32.totalorder %s24, 1
      %p110 = por %p108, %p109
      %p112 = scmp.ne.s32.totalorder %s97, %s111
      %p113 = scmp.eq.s32.totalorder %s24, 0
      %p114 = por %p112, %p113
      %s116 = sadd.s32 %s115, 1
      %p119 = scmp.eq.s32.totalorder %s18, 1
      %p120 = scmp.ne.s32.totalorder %s115, %s117
      %p121 = scmp.eq.s32.totalorder %s18, 0
      %p122 = por %p120, %p121
      %p123 = scmp.ne.s32.totalorder %s115, %s117
      %p124 = scmp.eq.s32.totalorder %s23, 1
      %p125 = por %p123, %p124
      %p126 = scmp.ne.s32.totalorder %s117, %s118
      %p127 = scmp.eq.s32.totalorder %s23, 0
      %p128 = por %p126, %p127
      %p129 = scmp.ne.s32.totalorder %s117, %s118
      %p130 = scmp.eq.s32.totalorder %s24, 1
      %p131 = por %p129, %p130
      %p133 = scmp.ne.s32.totalorder %s118, %s132
      %p134 = scmp.eq.s32.totalorder %s24, 0
      %p135 = por %p133, %p134
      %s136 = ssub.s32 %s18, %s25
      %p137 = scmp.eq.s32.totalorder %s136, 0
      %s139 = sadd.s32 %s138, 1
      %s140 = scalar_select %p137, %s138, %s139
      %p143 = pneg %p137
      %p144 = scmp.eq.s32.totalorder %s18, 1
      %p145 = por %p143, %p144
      %p146 = scmp.ne.s32.totalorder %s138, %s141
      %p147 = scmp.eq.s32.totalorder %s18, 0
      %p148 = por %p146, %p147
      %p149 = scmp.ne.s32.totalorder %s138, %s141
      %p150 = scmp.eq.s32.totalorder %s23, 1
      %p151 = por %p149, %p150
      %p152 = scmp.ne.s32.totalorder %s141, %s142
      %p153 = scmp.eq.s32.totalorder %s23, 0
      %p154 = por %p152, %p153
      %p155 = scmp.ne.s32.totalorder %s141, %s142
      %p156 = scmp.eq.s32.totalorder %s24, 1
      %p157 = por %p155, %p156
      %p159 = scmp.ne.s32.totalorder %s142, %s158
      %p160 = scmp.eq.s32.totalorder %s24, 0
      %p161 = por %p159, %p160
      %p162 = scmp.le.s32.totalorder 1, %s18
      %p163 = scmp.lt.s32.totalorder %s18, 3
      %p164 = pnand %p162, %p163
      %p165 = pneg %p164
      // Predicated region
      $region9: #{tpu_custom_call.1} parent=5 // pred_check
        _
      $region10: #{tpu_custom_call.1} parent=5 // pred_check_branch
        %167 = sbr.rel (%p164) target = $region12
      $region11: #{tpu_custom_call.1} parent=5 // pred_region
        %s168 = ssub.s32 %s18, 1
        // Predicated region
        $region13: #{tpu_custom_call.1} parent=11 // pred_check
          %p169 = pneg %p65
        $region14: #{tpu_custom_call.1} parent=11 // pred_check_branch
          %171 = sbr.rel (%p169) target = $region16
        $region15: #{tpu_custom_call.1} parent=11 // pred_region
          %s173 = ssub.s32 2048, 2048
          %174 = vsyncadd [#allocation6], %s173
          %s175 = sshll.u32 [#allocation5], 4
          %s176 = int_to_ptr.vmem [resolvable:$true] %s175
          %181 = dma.hbm_to_vmem [thread:$0]  %s1, 2048, %s176, [#allocation6], 128, 128, 8
        $region16: #{tpu_custom_call.1} parent=11 // pred_fallthru
          _
        // Predicated region
        $region17: #{tpu_custom_call.1} parent=11 // pred_check
          %p182 = pneg %p86
        $region18: #{tpu_custom_call.1} parent=11 // pred_check_branch
          %184 = sbr.rel (%p182) target = $region20
        $region19: #{tpu_custom_call.1} parent=11 // pred_region
          _
        $region20: #{tpu_custom_call.1} parent=11 // pred_fallthru
          _
        // Predicated region
        $region21: #{tpu_custom_call.1} parent=11 // pred_check
          %p185 = pneg %p107
        $region22: #{tpu_custom_call.1} parent=11 // pred_check_branch
          %187 = sbr.rel (%p185) target = $region24
        $region23: #{tpu_custom_call.1} parent=11 // pred_region
          %s189 = ssub.s32 2048, 2048
          %190 = vsyncadd [#allocation6], %s189
          %s191 = sshll.u32 [#allocation7], 4
          %s192 = int_to_ptr.vmem [resolvable:$true] %s191
          %197 = dma.hbm_to_vmem [thread:$0]  %s3, 2048, %s192, [#allocation6], 128, 128, 8
        $region24: #{tpu_custom_call.1} parent=11 // pred_fallthru
          _
        // Predicated region
        $region25: #{tpu_custom_call.1} parent=11 // pred_check
          %p198 = pneg %p128
        $region26: #{tpu_custom_call.1} parent=11 // pred_check_branch
          %200 = sbr.rel (%p198) target = $region28
        $region27: #{tpu_custom_call.1} parent=11 // pred_region
          _
        $region28: #{tpu_custom_call.1} parent=11 // pred_fallthru
          _
      $region12: #{tpu_custom_call.1} parent=5 // pred_fallthru
        _
      %p201 = scmp.lt.s32.totalorder %s18, 2
      // Predicated region
      $region29: #{tpu_custom_call.1} parent=5 // pred_check
        %p202 = pneg %p201
      $region30: #{tpu_custom_call.1} parent=5 // pred_check_branch
        %204 = sbr.rel (%p202) target = $region32
      $region31: #{tpu_custom_call.1} parent=5 // pred_region
        // Predicated region
        $region33: #{tpu_custom_call.1} parent=31 // pred_check
          %p205 = pneg %p38
        $region34: #{tpu_custom_call.1} parent=31 // pred_check_branch
          %207 = sbr.rel (%p205) target = $region36
        $region35: #{tpu_custom_call.1} parent=31 // pred_region
          %s208 = sand.u32 %s28, 1
          %s209 = scalar_lea.sflag [#allocation3], %s208
          %s210 = sand.u32 %s28, 1
          %s211 = smul.addr %s210, 16
          %s212 = scalar_lea.vmem [#allocation2], %s211
          %s214 = ssub.s32 256, 256
          %215 = vsyncadd %s209, %s214
          %s216 = smul.addr %s18, 2
          %s217 = smul.addr %s216, 128
          %s218 = scalar_lea.hbm %s0, %s217
          %s220 = sshll.u32 %s212, 4
          %s221 = int_to_ptr.vmem [resolvable:$true] %s220
          %223 = dma.hbm_to_vmem [thread:$0]  %s218, 256, %s221, %s209
        $region36: #{tpu_custom_call.1} parent=31 // pred_fallthru
          _
      $region32: #{tpu_custom_call.1} parent=5 // pred_fallthru
        _
      %p224 = scmp.le.s32.totalorder 1, %s18
      %p225 = scmp.lt.s32.totalorder %s18, 3
      %p226 = pnand %p224, %p225
      %p227 = pneg %p226
      // Predicated region
      $region37: #{tpu_custom_call.1} parent=5 // pred_check
        _
      $region38: #{tpu_custom_call.1} parent=5 // pred_check_branch
        %229 = sbr.rel (%p226) target = $region40
      $region39: #{tpu_custom_call.1} parent=5 // pred_region
        %s230 = ssub.s32 %s18, 1
        %s231 = sand.u32 %s31, 1
        %s232 = scalar_lea.sflag [#allocation3], %s231
        %s233 = sand.u32 %s31, 1
        %s234 = smul.addr %s233, 16
        %s235 = scalar_lea.vmem [#allocation2], %s234
        // Predicated region
        $region41: #{tpu_custom_call.1} parent=39 // pred_check
          %p236 = pneg %p44
        $region42: #{tpu_custom_call.1} parent=39 // pred_check_branch
          %238 = sbr.rel (%p236) target = $region44
        $region43: #{tpu_custom_call.1} parent=39 // pred_region
          %239 = dma.done %s232, 256
        $region44: #{tpu_custom_call.1} parent=39 // pred_fallthru
          _
        // Predicated region
        $region45: #{tpu_custom_call.1} parent=39 // pred_check
          %p240 = pneg %p65
        $region46: #{tpu_custom_call.1} parent=39 // pred_check_branch
          %242 = sbr.rel (%p240) target = $region48
        $region47: #{tpu_custom_call.1} parent=39 // pred_region
          %243 = dma.done [#allocation6], 2048
        $region48: #{tpu_custom_call.1} parent=39 // pred_fallthru
          _
        // Predicated region
        $region49: #{tpu_custom_call.1} parent=39 // pred_check
          %p244 = pneg %p107
        $region50: #{tpu_custom_call.1} parent=39 // pred_check_branch
          %246 = sbr.rel (%p244) target = $region52
        $region51: #{tpu_custom_call.1} parent=39 // pred_region
          %247 = dma.done [#allocation6], 2048
        $region52: #{tpu_custom_call.1} parent=39 // pred_fallthru
          _
        %s248 = sand.u32 %s31, 1
        %s249 = scalar_lea.sflag [#allocation3], %s248
        %s250 = sand.u32 %s31, 1
        %s251 = smul.addr %s250, 16
        %s252 = scalar_lea.vmem [#allocation2], %s251
        %p253 = pneg %p44
        %p254 = pneg %p41
        %p255 = pneg %p65
        %p256 = pneg %p62
        %p257 = pneg %p86
        %p258 = pneg %p83
        %p259 = pneg %p107
        %p260 = pneg %p104
        %p261 = pneg %p128
        %p262 = pneg %p125
        %p263 = pneg %p154
        %p264 = pneg %p151
        %s265 = sand.u32 %s141, 1
        %s266 = scalar_lea.sflag [#allocation4], %s265
        %s267 = sand.u32 %s141, 1
        %s268 = smul.addr %s267, 8
        %s269 = scalar_lea.vmem [#allocation8], %s268
        %v270 = vld [vmem:[%s235] sm:$0xff]
        %v271 = vld [vmem:[%s235 + $0x8] sm:$0xff]
        %v272 = vld [vmem:[#allocation5] sm:$0xff]
        %v273 = vld [vmem:[#allocation5 + $0x8] sm:$0xff]
        %v274 = vld [vmem:[#allocation5 + $0x10] sm:$0xff]
        %v275 = vld [vmem:[#allocation5 + $0x18] sm:$0xff]
        %v276 = vld [vmem:[#allocation5 + $0x20] sm:$0xff]
        %v277 = vld [vmem:[#allocation5 + $0x28] sm:$0xff]
        %v278 = vld [vmem:[#allocation5 + $0x30] sm:$0xff]
        %v279 = vld [vmem:[#allocation5 + $0x38] sm:$0xff]
        %v280 = vld [vmem:[#allocation5 + $0x40] sm:$0xff]
        %v281 = vld [vmem:[#allocation5 + $0x48] sm:$0xff]
        %v282 = vld [vmem:[#allocation5 + $0x50] sm:$0xff]
        %v283 = vld [vmem:[#allocation5 + $0x58] sm:$0xff]
        %v284 = vld [vmem:[#allocation5 + $0x60] sm:$0xff]
        %v285 = vld [vmem:[#allocation5 + $0x68] sm:$0xff]
        %v286 = vld [vmem:[#allocation5 + $0x70] sm:$0xff]
        %v287 = vld [vmem:[#allocation5 + $0x78] sm:$0xff]
        %v288 = vld [vmem:[%s2] sm:$0x1]
        %v290 = vlaneseq
        %v291 = vshrl.u32 %v290, 7
        %v292 = vsub.s32 0, %v291
        %v293 = vrot.slane %v288, %v292
        %295 = vmatprep.subr.mxu0 0.0
        %296 = vmatpush1.msra.mxu0 %v287
        %297 = vmatprep.subr.mxu0 0.0
        %298 = vmatpush1.msra.mxu0 %v286
        %299 = vmatprep.subr.mxu0 0.0
        %300 = vmatpush1.msra.mxu0 %v285
        %301 = vmatprep.subr.mxu0 0.0
        %302 = vmatpush1.msra.mxu0 %v284
        %303 = vmatprep.subr.mxu0 0.0
        %304 = vmatpush1.msra.mxu0 %v283
        %305 = vmatprep.subr.mxu0 0.0
        %306 = vmatpush1.msra.mxu0 %v282
        %307 = vmatprep.subr.mxu0 0.0
        %308 = vmatpush1.msra.mxu0 %v281
        %309 = vmatprep.subr.mxu0 0.0
        %310 = vmatpush1.msra.mxu0 %v280
        %311 = vmatprep.subr.mxu0 0.0
        %312 = vmatpush1.msra.mxu0 %v279
        %313 = vmatprep.subr.mxu0 0.0
        %314 = vmatpush1.msra.mxu0 %v278
        %315 = vmatprep.subr.mxu0 0.0
        %316 = vmatpush1.msra.mxu0 %v277
        %317 = vmatprep.subr.mxu0 0.0
        %318 = vmatpush1.msra.mxu0 %v276
        %319 = vmatprep.subr.mxu0 0.0
        %320 = vmatpush1.msra.mxu0 %v275
        %321 = vmatprep.subr.mxu0 0.0
        %322 = vmatpush1.msra.mxu0 %v274
        %323 = vmatprep.subr.mxu0 0.0
        %324 = vmatpush1.msra.mxu0 %v273
        %325 = vmatprep.subr.mxu0 0.0
        %326 = vmatpush1.msra.mxu0 %v272
        %327 = vmatprep.subr.mxu0 0.0
        %328 = vmatpush2.msra.mxu0 0.0
        %329 = vmatprep.subr.mxu0 0.0
        %330 = vmatpush2.msra.mxu0 0.0
        %331 = vmatprep.subr.mxu0 0.0
        %332 = vmatpush2.msra.mxu0 0.0
        %333 = vmatprep.subr.mxu0 0.0
        %334 = vmatpush2.msra.mxu0 0.0
        %335 = vmatprep.subr.mxu0 0.0
        %336 = vmatpush2.msra.mxu0 0.0
        %337 = vmatprep.subr.mxu0 0.0
        %338 = vmatpush2.msra.mxu0 0.0
        %339 = vmatprep.subr.mxu0 0.0
        %340 = vmatpush2.msra.mxu0 0.0
        %341 = vmatprep.subr.mxu0 0.0
        %342 = vmatpush2.msra.mxu0 0.0
        %343 = vmatprep.subr.mxu0 0.0
        %344 = vmatpush2.msra.mxu0 0.0
        %345 = vmatprep.subr.mxu0 0.0
        %346 = vmatpush2.msra.mxu0 0.0
        %347 = vmatprep.subr.mxu0 0.0
        %348 = vmatpush2.msra.mxu0 0.0
        %349 = vmatprep.subr.mxu0 0.0
        %350 = vmatpush2.msra.mxu0 0.0
        %351 = vmatprep.subr.mxu0 0.0
        %352 = vmatpush2.msra.mxu0 0.0
        %353 = vmatprep.subr.mxu0 0.0
        %354 = vmatpush2.msra.mxu0 0.0
        %355 = vmatprep.subr.mxu0 0.0
        %356 = vmatpush2.msra.mxu0 0.0
        %357 = vmatprep.subr.mxu0 0.0
        %358 = vmatpush2.msra.mxu0 0.0
        %359 = vmatprep.mubr.f32.mxu0 0.0
        %360 = vmatmul.mubr.f32.gmra.mxu0 %v270
        %v361 = vpop.f32.mrf.mxu0
        %v362 = vadd.f32 %v293, %v361
        %v363 = vpop.f32.mrf.mxu0
        %364 = vdwg.mxu0
        %v365 = vtanh.pop %v362
        %v366 = vld [vmem:[#allocation7] sm:$0xff]
        %v367 = vld [vmem:[#allocation7 + $0x8] sm:$0xff]
        %v368 = vld [vmem:[#allocation7 + $0x10] sm:$0xff]
        %v369 = vld [vmem:[#allocation7 + $0x18] sm:$0xff]
        %v370 = vld [vmem:[#allocation7 + $0x20] sm:$0xff]
        %v371 = vld [vmem:[#allocation7 + $0x28] sm:$0xff]
        %v372 = vld [vmem:[#allocation7 + $0x30] sm:$0xff]
        %v373 = vld [vmem:[#allocation7 + $0x38] sm:$0xff]
        %v374 = vld [vmem:[#allocation7 + $0x40] sm:$0xff]
        %v375 = vld [vmem:[#allocation7 + $0x48] sm:$0xff]
        %v376 = vld [vmem:[#allocation7 + $0x50] sm:$0xff]
        %v377 = vld [vmem:[#allocation7 + $0x58] sm:$0xff]
        %v378 = vld [vmem:[#allocation7 + $0x60] sm:$0xff]
        %v379 = vld [vmem:[#allocation7 + $0x68] sm:$0xff]
        %v380 = vld [vmem:[#allocation7 + $0x70] sm:$0xff]
        %v381 = vld [vmem:[#allocation7 + $0x78] sm:$0xff]
        %v382 = vld [vmem:[%s4] sm:$0x1]
        %v384 = vlaneseq
        %v385 = vshrl.u32 %v384, 7
        %v386 = vsub.s32 0, %v385
        %v387 = vrot.slane %v382, %v386
        %389 = vmatprep.subr.mxu0 0.0
        %390 = vmatpush1.msra.mxu0 %v381
        %391 = vmatprep.subr.mxu0 0.0
        %392 = vmatpush1.msra.mxu0 %v380
        %393 = vmatprep.subr.mxu0 0.0
        %394 = vmatpush1.msra.mxu0 %v379
        %395 = vmatprep.subr.mxu0 0.0
        %396 = vmatpush1.msra.mxu0 %v378
        %397 = vmatprep.subr.mxu0 0.0
        %398 = vmatpush1.msra.mxu0 %v377
        %399 = vmatprep.subr.mxu0 0.0
        %400 = vmatpush1.msra.mxu0 %v376
        %401 = vmatprep.subr.mxu0 0.0
        %402 = vmatpush1.msra.mxu0 %v375
        %403 = vmatprep.subr.mxu0 0.0
        %404 = vmatpush1.msra.mxu0 %v374
        %405 = vmatprep.subr.mxu0 0.0
        %406 = vmatpush1.msra.mxu0 %v373
        %407 = vmatprep.subr.mxu0 0.0
        %408 = vmatpush1.msra.mxu0 %v372
        %409 = vmatprep.subr.mxu0 0.0
        %410 = vmatpush1.msra.mxu0 %v371
        %411 = vmatprep.subr.mxu0 0.0
        %412 = vmatpush1.msra.mxu0 %v370
        %413 = vmatprep.subr.mxu0 0.0
        %414 = vmatpush1.msra.mxu0 %v369
        %415 = vmatprep.subr.mxu0 0.0
        %416 = vmatpush1.msra.mxu0 %v368
        %417 = vmatprep.subr.mxu0 0.0
        %418 = vmatpush1.msra.mxu0 %v367
        %419 = vmatprep.subr.mxu0 0.0
        %420 = vmatpush1.msra.mxu0 %v366
        %421 = vmatprep.subr.mxu0 0.0
        %422 = vmatpush2.msra.mxu0 0.0
        %423 = vmatprep.subr.mxu0 0.0
        %424 = vmatpush2.msra.mxu0 0.0
        %425 = vmatprep.subr.mxu0 0.0
        %426 = vmatpush2.msra.mxu0 0.0
        %427 = vmatprep.subr.mxu0 0.0
        %428 = vmatpush2.msra.mxu0 0.0
        %429 = vmatprep.subr.mxu0 0.0
        %430 = vmatpush2.msra.mxu0 0.0
        %431 = vmatprep.subr.mxu0 0.0
        %432 = vmatpush2.msra.mxu0 0.0
        %433 = vmatprep.subr.mxu0 0.0
        %434 = vmatpush2.msra.mxu0 0.0
        %435 = vmatprep.subr.mxu0 0.0
        %436 = vmatpush2.msra.mxu0 0.0
        %437 = vmatprep.subr.mxu0 0.0
        %438 = vmatpush2.msra.mxu0 0.0
        %439 = vmatprep.subr.mxu0 0.0
        %440 = vmatpush2.msra.mxu0 0.0
        %441 = vmatprep.subr.mxu0 0.0
        %442 = vmatpush2.msra.mxu0 0.0
        %443 = vmatprep.subr.mxu0 0.0
        %444 = vmatpush2.msra.mxu0 0.0
        %445 = vmatprep.subr.mxu0 0.0
        %446 = vmatpush2.msra.mxu0 0.0
        %447 = vmatprep.subr.mxu0 0.0
        %448 = vmatpush2.msra.mxu0 0.0
        %449 = vmatprep.subr.mxu0 0.0
        %450 = vmatpush2.msra.mxu0 0.0
        %451 = vmatprep.subr.mxu0 0.0
        %452 = vmatpush2.msra.mxu0 0.0
        %453 = vmatprep.mubr.f32.mxu0 0.0
        %454 = vmatmul.mubr.f32.gmra.mxu0 %v365
        %v455 = vpop.f32.mrf.mxu0
        %v456 = vadd.f32 %v387, %v455
        %v457 = vpop.f32.mrf.mxu0
        %458 = vdwg.mxu0
        %v459 = vadd.f32 %v271, %v456
        %460 = vst [vmem:[%s269] sm:$0xff] %v459
        %s461 = sand.u32 %s141, 1
        %s462 = scalar_lea.sflag [#allocation4], %s461
        %s463 = sand.u32 %s141, 1
        %s464 = smul.addr %s463, 8
        %s465 = scalar_lea.vmem [#allocation8], %s464
        // Predicated region
        $region53: #{tpu_custom_call.1} parent=39 // pred_check
          %p466 = pneg %p151
        $region54: #{tpu_custom_call.1} parent=39 // pred_check_branch
          %468 = sbr.rel (%p466) target = $region56
        $region55: #{tpu_custom_call.1} parent=39 // pred_region
          %s470 = ssub.s32 128, 128
          %471 = vsyncadd %s462, %s470
          %s472 = smul.addr %s23, 2
          %s473 = sadd.s32 1, %s472
          %s474 = smul.addr %s473, 128
          %s475 = scalar_lea.hbm %s5, %s474
          %s477 = sshll.u32 %s465, 4
          %s478 = int_to_ptr.vmem [resolvable:$true] %s477
          %480 = dma.vmem_to_hbm [thread:$0]  %s478, 128, %s475, %s462
        $region56: #{tpu_custom_call.1} parent=39 // pred_fallthru
          _
      $region40: #{tpu_custom_call.1} parent=5 // pred_fallthru
        _
      %p481 = scmp.le.s32.totalorder 2, %s18
      // Predicated region
      $region57: #{tpu_custom_call.1} parent=5 // pred_check
        %p482 = pneg %p481
      $region58: #{tpu_custom_call.1} parent=5 // pred_check_branch
        %484 = sbr.rel (%p482) target = $region60
      $region59: #{tpu_custom_call.1} parent=5 // pred_region
        %s485 = ssub.s32 %s18, 2
        // Predicated region
        $region61: #{tpu_custom_call.1} parent=59 // pred_check
          %p486 = pneg %p157
        $region62: #{tpu_custom_call.1} parent=59 // pred_check_branch
          %488 = sbr.rel (%p486) target = $region64
        $region63: #{tpu_custom_call.1} parent=59 // pred_region
          %s489 = sand.u32 %s142, 1
          %s490 = scalar_lea.sflag [#allocation4], %s489
          %s491 = sand.u32 %s142, 1
          %s492 = smul.addr %s491, 8
          %s493 = scalar_lea.vmem [#allocation8], %s492
          %494 = dma.done %s490, 128
        $region64: #{tpu_custom_call.1} parent=59 // pred_fallthru
          _
      $region60: #{tpu_custom_call.1} parent=5 // pred_fallthru
        _
    $region6: #{tpu_custom_call.1} parent=1 // loop_footer
      %s22 = sadd.s32 1, %s18
    $region7: #{tpu_custom_call.1} parent=1 // loop_footer_branch
      %17 = sbr.rel target = $region3
    $region8: #{tpu_custom_call.1} parent=1 // loop_exit
      _
    %495 = vsyncpa [#allocation3], 1
    %s496 = scalar_lea.sflag [#allocation3], 1
    %497 = vsyncpa %s496, 1
    %498 = vsyncpa [#allocation6], 1
    %499 = vsyncpa [#allocation4], 1
    %s500 = scalar_lea.sflag [#allocation4], 1
    %501 = vsyncpa %s500, 1

</llo_original>
